<compile_context>
chip_gen: v7x
topology: tpu7x:2x2x1
jax: 0.10.0
libtpu: 0.0.40
codegen_flags: <defaults>
</compile_context>

<pallas_src>
import functools

import jax
import jax.numpy as jnp
from jax.experimental import pallas as pl
from jax.experimental.pallas import tpu as pltpu

EPS = 1e-5
LANE = 128


def _round_up(x, m):
    return (x + m - 1) // m * m


def _stats_kernel(x_ref, w_ref, b_ref, sum_ref, sumsq_ref, *, n_valid):
    """Phase 1: accumulate per-channel sum and sum-of-squares of y = x + xW + b."""
    i = pl.program_id(0)

    @pl.when(i == 0)
    def _init():
        sum_ref[...] = jnp.zeros_like(sum_ref)
        sumsq_ref[...] = jnp.zeros_like(sumsq_ref)

    tile_n = x_ref.shape[0]
    x = x_ref[...]                                           # f32 (tile_n, C_pad)
    s = jnp.dot(x.astype(jnp.bfloat16), w_ref[...],          # bf16 MXU, f32 accumulation
                preferred_element_type=jnp.float32)
    y = x + s + b_ref[...]

    if n_valid % tile_n != 0:                                # static: only when rows padded
        row = jax.lax.broadcasted_iota(jnp.int32, (tile_n, 1), 0) + i * tile_n
        y = jnp.where(row < n_valid, y, 0.0)

    sum_ref[...] += jnp.sum(y, axis=0, keepdims=True)
    sumsq_ref[...] += jnp.sum(y * y, axis=0, keepdims=True)


def _normalize_kernel(x_ref, w_ref, b_ref, scale_ref, shift_ref, o_ref):
    """Phase 2: recompute y and apply the folded BatchNorm affine (one FMA/elem)."""
    x = x_ref[...]
    s = jnp.dot(x.astype(jnp.bfloat16), w_ref[...],
                preferred_element_type=jnp.float32)
    y = x + s + b_ref[...]
    o_ref[...] = (y * scale_ref[...] + shift_ref[...]).astype(o_ref.dtype)


def skip_connection_forward(x, w, b, gamma, beta, *, tile_n=1024):
    """x: (B, L, C) f32; sublayer = Linear(C, C) with weight w (C, C), bias b (C,)."""
    B, L, C = x.shape
    N = B * L

    # Lane-dense channel padding (inert: zero weight cols / bias / gamma / beta).
    C_pad = _round_up(C, LANE)
    # Row tiling: keep tiles modest so double-buffered f32 tiles fit all generations.
    TILE_N = min(tile_n, _round_up(N, 8))
    N_pad = _round_up(N, TILE_N)
    n_tiles = N_pad // TILE_N

    x2d = jnp.pad(x.reshape(N, C), ((0, N_pad - N), (0, C_pad - C)))
    w_p = jnp.pad(w, ((0, C_pad - C), (0, C_pad - C))).astype(jnp.bfloat16)
    b_p = jnp.pad(b, (0, C_pad - C)).reshape(1, C_pad).astype(jnp.float32)
    gamma_p = jnp.pad(gamma, (0, C_pad - C)).reshape(1, C_pad).astype(jnp.float32)
    beta_p = jnp.pad(beta, (0, C_pad - C)).reshape(1, C_pad).astype(jnp.float32)

    matmul_flops = 2 * N_pad * C_pad * C_pad
    x_bytes = N_pad * C_pad * 4
    w_bytes = C_pad * C_pad * 2

    x_spec = pl.BlockSpec((TILE_N, C_pad), lambda i: (i, 0))
    w_spec = pl.BlockSpec((C_pad, C_pad), lambda i: (0, 0))       # VMEM-resident
    vec_spec = pl.BlockSpec((1, C_pad), lambda i: (0, 0))         # VMEM-resident

    # ---- Phase 1: per-channel statistics (accumulator axis -> "arbitrary") ----
    sums, sumsq = pl.pallas_call(
        functools.partial(_stats_kernel, n_valid=N),
        out_shape=(jax.ShapeDtypeStruct((1, C_pad), jnp.float32),
                   jax.ShapeDtypeStruct((1, C_pad), jnp.float32)),
        grid=(n_tiles,),
        in_specs=[x_spec, w_spec, vec_spec],
        out_specs=(vec_spec, vec_spec),
        compiler_params=pltpu.CompilerParams(
            dimension_semantics=("arbitrary",),
            vmem_limit_bytes=32 * 1024 * 1024),
        cost_estimate=pl.CostEstimate(
            flops=matmul_flops + 6 * N_pad * C_pad,
            transcendentals=0,
            bytes_accessed=x_bytes + w_bytes + 3 * C_pad * 4),
    )(x2d, w_p, b_p)

    # Fold BatchNorm into a single affine, computed once on (1, C)-sized data.
    # TODO(synk): switch to per-tile Welford/M2 combination if activation scales make
    # E[y^2] - mean^2 cancellation-prone; f32 accumulation is fine at normal scales.
    inv_n = jnp.float32(1.0 / N)
    mean = sums * inv_n
    var = jnp.maximum(sumsq * inv_n - mean * mean, 0.0)           # biased var (PyTorch fwd)
    scale = gamma_p * jax.lax.rsqrt(var + EPS)
    shift = beta_p - mean * scale

    # ---- Phase 2: normalize (embarrassingly parallel over row tiles) ----
    out2d = pl.pallas_call(
        _normalize_kernel,
        out_shape=jax.ShapeDtypeStruct((N_pad, C_pad), jnp.float32),
        grid=(n_tiles,),
        in_specs=[x_spec, w_spec, vec_spec, vec_spec, vec_spec],
        out_specs=x_spec,
        compiler_params=pltpu.CompilerParams(
            dimension_semantics=("parallel",),
            vmem_limit_bytes=32 * 1024 * 1024),
        cost_estimate=pl.CostEstimate(
            flops=matmul_flops + 4 * N_pad * C_pad,
            transcendentals=0,
            bytes_accessed=2 * x_bytes + w_bytes + 3 * C_pad * 4),
    )(x2d, w_p, b_p, scale, shift)

    return out2d[:N, :C].reshape(B, L, C)


def reference_forward(x, w, b, gamma, beta):
    """Pure-JAX reference mirroring the PyTorch module (training-mode BN)."""
    y = x + (jnp.einsum("blc,cd->bld", x, w) + b)
    mean = jnp.mean(y, axis=(0, 1), keepdims=True)
    var = jnp.mean((y - mean) ** 2, axis=(0, 1), keepdims=True)
    y_hat = (y - mean) * jax.lax.rsqrt(var + EPS)
    return y_hat * gamma + beta


if __name__ == "__main__":
    B, L, C = 2, 8, 32  # batch, seq length, hidden size (size == C)

    key = jax.random.PRNGKey(0)
    kx, kw, kb = jax.random.split(key, 3)

    x = jax.random.normal(kx, (B, L, C), dtype=jnp.float32)
    # Deterministic sublayer (Linear C->C) parameters.
    w = jax.random.normal(kw, (C, C), dtype=jnp.float32) * (1.0 / jnp.sqrt(C))
    b = jax.random.normal(kb, (C,), dtype=jnp.float32) * 0.01
    # BatchNorm1d init: weight = 1, bias = 0.
    gamma = jnp.ones((C,), dtype=jnp.float32)
    beta = jnp.zeros((C,), dtype=jnp.float32)

    out = jax.block_until_ready(skip_connection_forward(x, w, b, gamma, beta))
    ref = reference_forward(x, w, b, gamma, beta)
    assert out.shape == (B, L, C)
    # bf16 MXU inputs (f32 accumulation) => slightly looser tolerance than pure f32.
    assert jnp.allclose(out, ref, atol=3e-2, rtol=3e-2), "mismatch vs reference (small)"

    # Second check: multi-tile grid with row masking (N=1200 -> tile 1024, grid=2).
    B2, L2 = 4, 300
    x2 = jax.random.normal(jax.random.PRNGKey(1), (B2, L2, C), dtype=jnp.float32)
    out2 = jax.block_until_ready(skip_connection_forward(x2, w, b, gamma, beta))
    ref2 = reference_forward(x2, w, b, gamma, beta)
    assert jnp.allclose(out2, ref2, atol=3e-2, rtol=3e-2), "mismatch vs reference (tiled)"

    print("KERNEL_OK")
</pallas_src>

<mosaic_0001>
module attributes {stable_mosaic.version = 11 : i64} {
  func.func @_stats_kernel(%arg0: i32, %arg1: memref<16x128xf32, #tpu.memory_space<vmem>>, %arg2: memref<128x128xbf16, #tpu.memory_space<vmem>>, %arg3: memref<1x128xf32, #tpu.memory_space<vmem>>, %arg4: memref<1x128xf32, #tpu.memory_space<vmem>>, %arg5: memref<1x128xf32, #tpu.memory_space<vmem>>) attributes {dimension_semantics = [#tpu.dimension_semantics<arbitrary>], iteration_bounds = array<i64: 1>, scalar_prefetch = 0 : i64, scratch_operands = 0 : i64, tpu.core_type = #tpu.core_type<tc>, window_params = [{transform_indices = @transform_0, window_bounds = array<i64: 16, 128>}, {pipeline_mode = #tpu.pipeline_mode<synchronous>, transform_indices = @transform_1, window_bounds = array<i64: 128, 128>}, {pipeline_mode = #tpu.pipeline_mode<synchronous>, transform_indices = @transform_2, window_bounds = array<i64: 1, 128>}, {pipeline_mode = #tpu.pipeline_mode<synchronous>, transform_indices = @transform_3, window_bounds = array<i64: 1, 128>}, {pipeline_mode = #tpu.pipeline_mode<synchronous>, transform_indices = @transform_4, window_bounds = array<i64: 1, 128>}]} {
    %c0_i32 = arith.constant 0 : i32
    %0 = arith.cmpi eq, %arg0, %c0_i32 : i32
    %1 = arith.extui %0 : i1 to i32
    %c0_i32_0 = arith.constant 0 : i32
    %2 = arith.cmpi ne, %1, %c0_i32_0 : i32
    scf.if %2 {
      %cst_16 = arith.constant 0.000000e+00 : f32
      %22 = vector.broadcast %cst_16 : f32 to vector<1x128xf32>
      %c0_17 = arith.constant 0 : index
      %c0_18 = arith.constant 0 : index
      %23 = vector.load %arg4[%c0_17, %c0_18] : memref<1x128xf32, #tpu.memory_space<vmem>>, vector<1x128xf32>
      tpu.vector_store %arg4[%c0_17, %c0_18], %22 {strides = array<i32>} : memref<1x128xf32, #tpu.memory_space<vmem>>, vector<1x128xf32>,
      %cst_19 = arith.constant 0.000000e+00 : f32
      %24 = vector.broadcast %cst_19 : f32 to vector<1x128xf32>
      %c0_20 = arith.constant 0 : index
      %c0_21 = arith.constant 0 : index
      %25 = vector.load %arg5[%c0_20, %c0_21] : memref<1x128xf32, #tpu.memory_space<vmem>>, vector<1x128xf32>
      tpu.vector_store %arg5[%c0_20, %c0_21], %24 {strides = array<i32>} : memref<1x128xf32, #tpu.memory_space<vmem>>, vector<1x128xf32>,
    } else {
    }
    %c0 = arith.constant 0 : index
    %c0_1 = arith.constant 0 : index
    %3 = vector.load %arg1[%c0, %c0_1] : memref<16x128xf32, #tpu.memory_space<vmem>>, vector<16x128xf32>
    %4 = arith.truncf %3 : vector<16x128xf32> to vector<16x128xbf16>
    %c0_2 = arith.constant 0 : index
    %c0_3 = arith.constant 0 : index
    %5 = vector.load %arg2[%c0_2, %c0_3] : memref<128x128xbf16, #tpu.memory_space<vmem>>, vector<128x128xbf16>
    %cst = arith.constant dense<0.000000e+00> : vector<16x128xf32>
    %6 = tpu.matmul %4, %5, %cst {dimension_numbers = #tpu.dot_dimension_numbers<[1], [0], [0], [1], [0, 0, 1, 1], [], []>} : vector<16x128xbf16>, vector<128x128xbf16>, vector<16x128xf32> -> vector<16x128xf32>
    %7 = arith.addf %3, %6 : vector<16x128xf32>
    %c0_4 = arith.constant 0 : index
    %c0_5 = arith.constant 0 : index
    %8 = vector.load %arg3[%c0_4, %c0_5] : memref<1x128xf32, #tpu.memory_space<vmem>>, vector<1x128xf32>
    %9 = vector.broadcast %8 : vector<1x128xf32> to vector<16x128xf32>
    %10 = arith.addf %7, %9 : vector<16x128xf32>
    %c0_6 = arith.constant 0 : index
    %c0_7 = arith.constant 0 : index
    %11 = vector.load %arg4[%c0_6, %c0_7] : memref<1x128xf32, #tpu.memory_space<vmem>>, vector<1x128xf32>
    %cst_8 = arith.constant dense<0.000000e+00> : vector<128xf32>
    %12 = vector.multi_reduction <add>, %10, %cst_8 [0] : vector<16x128xf32> to vector<128xf32>
    %13 = vector.shape_cast %12 : vector<128xf32> to vector<1x128xf32>
    %14 = arith.addf %11, %13 : vector<1x128xf32>
    %c0_9 = arith.constant 0 : index
    %c0_10 = arith.constant 0 : index
    %15 = vector.load %arg4[%c0_9, %c0_10] : memref<1x128xf32, #tpu.memory_space<vmem>>, vector<1x128xf32>
    tpu.vector_store %arg4[%c0_9, %c0_10], %14 {strides = array<i32>} : memref<1x128xf32, #tpu.memory_space<vmem>>, vector<1x128xf32>,
    %c0_11 = arith.constant 0 : index
    %c0_12 = arith.constant 0 : index
    %16 = vector.load %arg5[%c0_11, %c0_12] : memref<1x128xf32, #tpu.memory_space<vmem>>, vector<1x128xf32>
    %17 = arith.mulf %10, %10 : vector<16x128xf32>
    %cst_13 = arith.constant dense<0.000000e+00> : vector<128xf32>
    %18 = vector.multi_reduction <add>, %17, %cst_13 [0] : vector<16x128xf32> to vector<128xf32>
    %19 = vector.shape_cast %18 : vector<128xf32> to vector<1x128xf32>
    %20 = arith.addf %16, %19 : vector<1x128xf32>
    %c0_14 = arith.constant 0 : index
    %c0_15 = arith.constant 0 : index
    %21 = vector.load %arg5[%c0_14, %c0_15] : memref<1x128xf32, #tpu.memory_space<vmem>>, vector<1x128xf32>
    tpu.vector_store %arg5[%c0_14, %c0_15], %20 {strides = array<i32>} : memref<1x128xf32, #tpu.memory_space<vmem>>, vector<1x128xf32>,
    return
  }
  func.func @transform_0(%arg0: i32) -> (i32, i32) {
    %c0_i32 = arith.constant 0 : i32
    %c0_i32_0 = arith.constant 0 : i32
    return %arg0, %c0_i32 : i32, i32
  }
  func.func @transform_1(%arg0: i32) -> (i32, i32) {
    %c0_i32 = arith.constant 0 : i32
    %c0_i32_0 = arith.constant 0 : i32
    %c0_i32_1 = arith.constant 0 : i32
    return %c0_i32, %c0_i32_0 : i32, i32
  }
  func.func @transform_2(%arg0: i32) -> (i32, i32) {
    %c0_i32 = arith.constant 0 : i32
    %c0_i32_0 = arith.constant 0 : i32
    %c0_i32_1 = arith.constant 0 : i32
    return %c0_i32, %c0_i32_0 : i32, i32
  }
  func.func @transform_3(%arg0: i32) -> (i32, i32) {
    %c0_i32 = arith.constant 0 : i32
    %c0_i32_0 = arith.constant 0 : i32
    %c0_i32_1 = arith.constant 0 : i32
    return %c0_i32, %c0_i32_0 : i32, i32
  }
  func.func @transform_4(%arg0: i32) -> (i32, i32) {
    %c0_i32 = arith.constant 0 : i32
    %c0_i32_0 = arith.constant 0 : i32
    %c0_i32_1 = arith.constant 0 : i32
    return %c0_i32, %c0_i32_0 : i32, i32
  }
}

</mosaic_0001>

<llo_original>
// kernel: tpu_custom_call.1
$region0: #{tpu_custom_call.1}
  #allocation0 [shape = 'u32[]', space=smem, size = 0x4, offset = 0x4, fixed_abs, tag = 'smem constant byte address 0x4 - core index']
  #allocation1 [shape = 'u32[144,128]{1,0:T(1,128)}', space=vmem, size = 0x12000, scoped, tag = 'internal scratch']
  %s0 = inlined_call_operand.hbm [shape: f32[16,128], index: 0, kind: input, shape index: {}]
  %s1 = inlined_call_operand.hbm [shape: bf16[128,128], index: 1, kind: input, shape index: {}]
  %s2 = inlined_call_operand.vmem [shape: f32[1,128], index: 2, kind: input, shape index: {}]
  %s3 = inlined_call_operand.hbm [shape: f32[1,128], index: 3, kind: output, shape index: {0}]
  %s4 = inlined_call_operand.hbm [shape: f32[1,128], index: 4, kind: output, shape index: {1}]
  %5 = xla_tuple %s3, %s4
  %s6 = sld [smem:[#allocation0]]
  $region42: #{tpu_custom_call.1} parent=0
    _
  %s8 = ssub.s32 1, %s6
  %s9 = scalar_select 0, %s8, %s6
  $region1: #{tpu_custom_call.1} parent=0
    #allocation2 [shape = 'u8[8192]{0}', space=vmem, size = 0x2000, scoped, tag = 'input window, operand 0, single buffered']
    #allocation3 [shape = 's32[1]{0}', space=sflag, size = 0x4, scoped, tag = 'scoped memory for tpu_custom_call.1']
    #allocation4 [shape = 's32[1]{0}', space=sflag, size = 0x4, scoped, tag = 'scoped memory for tpu_custom_call.1']
    #allocation5 [shape = 'u8[32768]{0}', space=vmem, size = 0x8000, scoped, tag = 'input window, operand 1, single buffered']
    #allocation6 [shape = 's32[1]{0}', space=sflag, size = 0x4, scoped, tag = 'scoped memory for tpu_custom_call.1']
    #allocation7 [shape = 'u8[512]{0}', space=vmem, size = 0x400, scoped, tag = 'output window, operand 0, single buffered']
    #allocation8 [shape = 'u8[512]{0}', space=vmem, size = 0x400, scoped, tag = 'output window, operand 1, single buffered']
    #allocation9 [shape = 's32[1]{0}', space=sflag, size = 0x4, scoped, tag = 'scoped memory for tpu_custom_call.1']
    %10 = vsyncpa [#allocation3], 0
    %11 = vsyncpa [#allocation6], 0
    %12 = vsyncpa [#allocation4], 0
    %13 = vsyncpa [#allocation9], 0
    // Predicated region
    $region2: #{tpu_custom_call.1} parent=1 // pred_check
      _
    $region3: #{tpu_custom_call.1} parent=1 // pred_check_branch
      %15 = sbr.rel (0) target = $region5
    $region4: #{tpu_custom_call.1} parent=1 // pred_region
      %s17 = ssub.s32 256, 256
      %18 = vsyncadd [#allocation3], %s17
      %s19 = sshll.u32 [#allocation2], 4
      %s20 = int_to_ptr.vmem [resolvable:$true] %s19
      %25 = dma.hbm_to_vmem [thread:$0]  %s0, 256, %s20, [#allocation3], 128, 128, 8
    $region5: #{tpu_custom_call.1} parent=1 // pred_fallthru
      _
    // Predicated region
    $region6: #{tpu_custom_call.1} parent=1 // pred_check
      _
    $region7: #{tpu_custom_call.1} parent=1 // pred_check_branch
      %27 = sbr.rel (0) target = $region9
    $region8: #{tpu_custom_call.1} parent=1 // pred_region
      %s29 = ssub.s32 1024, 1024
      %30 = vsyncadd [#allocation6], %s29
      %s31 = sshll.u32 [#allocation5], 4
      %s32 = int_to_ptr.vmem [resolvable:$true] %s31
      %37 = dma.hbm_to_vmem [thread:$0]  %s1, 1024, %s32, [#allocation6], 64, 64, 4
    $region9: #{tpu_custom_call.1} parent=1 // pred_fallthru
      _
    // Predicated region
    $region10: #{tpu_custom_call.1} parent=1 // pred_check
      _
    $region11: #{tpu_custom_call.1} parent=1 // pred_check_branch
      %39 = sbr.rel (0) target = $region13
    $region12: #{tpu_custom_call.1} parent=1 // pred_region
      _
    $region13: #{tpu_custom_call.1} parent=1 // pred_fallthru
      _
    // Predicated region
    $region14: #{tpu_custom_call.1} parent=1 // pred_check
      _
    $region15: #{tpu_custom_call.1} parent=1 // pred_check_branch
      %41 = sbr.rel (0) target = $region17
    $region16: #{tpu_custom_call.1} parent=1 // pred_region
      %42 = dma.done [#allocation3], 256
    $region17: #{tpu_custom_call.1} parent=1 // pred_fallthru
      _
    // Predicated region
    $region18: #{tpu_custom_call.1} parent=1 // pred_check
      _
    $region19: #{tpu_custom_call.1} parent=1 // pred_check_branch
      %44 = sbr.rel (0) target = $region21
    $region20: #{tpu_custom_call.1} parent=1 // pred_region
      %45 = dma.done [#allocation6], 1024
    $region21: #{tpu_custom_call.1} parent=1 // pred_fallthru
      _
    %p47 = scmp.eq.s32.totalorder 0, 0
    // Predicated region
    $region22: #{tpu_custom_call.1} parent=1 // pred_check
      %p48 = pneg %p47
    $region23: #{tpu_custom_call.1} parent=1 // pred_check_branch
      %50 = sbr.rel (%p48) target = $region25
    $region24: #{tpu_custom_call.1} parent=1 // pred_region
      %51 = vst [vmem:[#allocation7] sm:$0x1] 0.0
      %52 = vst [vmem:[#allocation8] sm:$0x1] 0.0
    $region25: #{tpu_custom_call.1} parent=1 // pred_fallthru
      _
    %v53 = vld [vmem:[#allocation2] sm:$0xff]
    %v54 = vld [vmem:[#allocation2 + $0x8] sm:$0xff]
    %v55 = vpack.c.bf16 %v54, %v53
    %v56 = vld [vmem:[#allocation5] sm:$0xf]
    %v57 = vld [vmem:[#allocation5 + $0x4] sm:$0xf]
    %v58 = vld [vmem:[#allocation5 + $0x8] sm:$0xf]
    %v59 = vld [vmem:[#allocation5 + $0xc] sm:$0xf]
    %v60 = vld [vmem:[#allocation5 + $0x10] sm:$0xf]
    %v61 = vld [vmem:[#allocation5 + $0x14] sm:$0xf]
    %v62 = vld [vmem:[#allocation5 + $0x18] sm:$0xf]
    %v63 = vld [vmem:[#allocation5 + $0x1c] sm:$0xf]
    %v64 = vld [vmem:[#allocation5 + $0x20] sm:$0xf]
    %v65 = vld [vmem:[#allocation5 + $0x24] sm:$0xf]
    %v66 = vld [vmem:[#allocation5 + $0x28] sm:$0xf]
    %v67 = vld [vmem:[#allocation5 + $0x2c] sm:$0xf]
    %v68 = vld [vmem:[#allocation5 + $0x30] sm:$0xf]
    %v69 = vld [vmem:[#allocation5 + $0x34] sm:$0xf]
    %v70 = vld [vmem:[#allocation5 + $0x38] sm:$0xf]
    %v71 = vld [vmem:[#allocation5 + $0x3c] sm:$0xf]
    %v88 = vunpack.c.l.b16 %v56
    %v89 = vunpack.c.l.b16 %v57
    %v90 = vunpack.c.l.b16 %v58
    %v91 = vunpack.c.l.b16 %v59
    %v92 = vunpack.c.l.b16 %v60
    %v93 = vunpack.c.l.b16 %v61
    %v94 = vunpack.c.l.b16 %v62
    %v95 = vunpack.c.l.b16 %v63
    %v96 = vunpack.c.l.b16 %v64
    %v97 = vunpack.c.l.b16 %v65
    %v98 = vunpack.c.l.b16 %v66
    %v99 = vunpack.c.l.b16 %v67
    %v100 = vunpack.c.l.b16 %v68
    %v101 = vunpack.c.l.b16 %v69
    %v102 = vunpack.c.l.b16 %v70
    %v103 = vunpack.c.l.b16 %v71
    %v104 = vpack.c.b16 %v89, %v88
    %v105 = vpack.c.b16 %v91, %v90
    %v106 = vpack.c.b16 %v93, %v92
    %v107 = vpack.c.b16 %v95, %v94
    %v108 = vpack.c.b16 %v97, %v96
    %v109 = vpack.c.b16 %v99, %v98
    %v110 = vpack.c.b16 %v101, %v100
    %v111 = vpack.c.b16 %v103, %v102
    %120 = vmatprep.subr.bf16.mxu0 0
    %121 = vmatpush1.bf16.msra.mxu0 %v104
    %122 = vmatprep.subr.bf16.mxu0 0
    %123 = vmatpush1.bf16.msra.mxu0 %v105
    %124 = vmatprep.subr.bf16.mxu0 0
    %125 = vmatpush1.bf16.msra.mxu0 %v106
    %126 = vmatprep.subr.bf16.mxu0 0
    %127 = vmatpush1.bf16.msra.mxu0 %v107
    %128 = vmatprep.subr.bf16.mxu0 0
    %129 = vmatpush1.bf16.msra.mxu0 %v108
    %130 = vmatprep.subr.bf16.mxu0 0
    %131 = vmatpush1.bf16.msra.mxu0 %v109
    %132 = vmatprep.subr.bf16.mxu0 0
    %133 = vmatpush1.bf16.msra.mxu0 %v110
    %134 = vmatprep.subr.bf16.mxu0 0
    %135 = vmatpush1.bf16.msra.mxu0 %v111
    %136 = vmatprep.subr.bf16.mxu0 0
    %137 = vmatpush1.bf16.msra.mxu0 0
    %138 = vmatprep.subr.bf16.mxu0 0
    %139 = vmatpush1.bf16.msra.mxu0 0
    %140 = vmatprep.subr.bf16.mxu0 0
    %141 = vmatpush1.bf16.msra.mxu0 0
    %142 = vmatprep.subr.bf16.mxu0 0
    %143 = vmatpush1.bf16.msra.mxu0 0
    %144 = vmatprep.subr.bf16.mxu0 0
    %145 = vmatpush1.bf16.msra.mxu0 0
    %146 = vmatprep.subr.bf16.mxu0 0
    %147 = vmatpush1.bf16.msra.mxu0 0
    %148 = vmatprep.subr.bf16.mxu0 0
    %149 = vmatpush1.bf16.msra.mxu0 0
    %150 = vmatprep.subr.bf16.mxu0 0
    %151 = vmatpush1.bf16.msra.mxu0 0
    %152 = vmatprep.mubr.bf16.mxu0 0
    %153 = vmatmul.mubr.bf16.gmra.mrb[0].mxu0 %v55
    %v154 = vpop.f32.mrb[0].mxu0
    %v155 = vadd.f32 0.0, %v154
    %v156 = vpop.f32.mrb[0].mxu0
    %v157 = vpop.f32.mrb[0].mxu0
    %v158 = vadd.f32 0.0, %v157
    %v159 = vpop.f32.mrb[0].mxu0
    %160 = vdwg.mxu0
    %v161 = vadd.f32 %v53, %v155
    %v162 = vadd.f32 %v54, %v158
    %v163 = vld [vmem:[%s2] sm:$0x1]
    %v165 = vlaneseq
    %v166 = vshrl.u32 %v165, 7
    %v167 = vsub.s32 0, %v166
    %v168 = vrot.slane %v163, %v167
    %v170 = vadd.f32 %v161, %v168
    %v171 = vadd.f32 %v162, %v168
    %v172 = vld [vmem:[#allocation7] sm:$0x1]
    %v173 = vadd.f32 %v170, %v171
    %v174 = vrot.slane %v173, 4
    %v175 = vadd.f32 %v173, %v174
    %v176 = vrot.slane %v175, 2
    %v177 = vadd.f32 %v175, %v176
    %v178 = vrot.slane %v177, 1
    %v179 = vadd.f32 %v177, %v178
    %v180 = vadd.f32 %v172, %v179
    %181 = vst [vmem:[#allocation7] sm:$0x1] %v180
    %v182 = vld [vmem:[#allocation8] sm:$0x1]
    %v183 = vmul.f32 %v170, %v170
    %v184 = vmul.f32 %v171, %v171
    %v185 = vadd.f32 %v183, %v184
    %v186 = vrot.slane %v185, 4
    %v187 = vadd.f32 %v185, %v186
    %v188 = vrot.slane %v187, 2
    %v189 = vadd.f32 %v187, %v188
    %v190 = vrot.slane %v189, 1
    %v191 = vadd.f32 %v189, %v190
    %v192 = vadd.f32 %v182, %v191
    %193 = vst [vmem:[#allocation8] sm:$0x1] %v192
    // Predicated region
    $region26: #{tpu_custom_call.1} parent=1 // pred_check
      _
    $region27: #{tpu_custom_call.1} parent=1 // pred_check_branch
      %195 = sbr.rel (0) target = $region29
    $region28: #{tpu_custom_call.1} parent=1 // pred_region
      %s197 = ssub.s32 16, 16
      %198 = vsyncadd [#allocation4], %s197
      %s200 = sshll.u32 [#allocation7], 4
      %s201 = int_to_ptr.vmem [resolvable:$true] %s200
      %203 = dma.vmem_to_hbm [thread:$0]  %s201, 16, %s3, [#allocation4]
    $region29: #{tpu_custom_call.1} parent=1 // pred_fallthru
      _
    // Predicated region
    $region30: #{tpu_custom_call.1} parent=1 // pred_check
      _
    $region31: #{tpu_custom_call.1} parent=1 // pred_check_branch
      %205 = sbr.rel (0) target = $region33
    $region32: #{tpu_custom_call.1} parent=1 // pred_region
      %s207 = ssub.s32 16, 16
      %208 = vsyncadd [#allocation9], %s207
      %s210 = sshll.u32 [#allocation8], 4
      %s211 = int_to_ptr.vmem [resolvable:$true] %s210
      %213 = dma.vmem_to_hbm [thread:$0]  %s211, 16, %s4, [#allocation9]
    $region33: #{tpu_custom_call.1} parent=1 // pred_fallthru
      _
    // Predicated region
    $region34: #{tpu_custom_call.1} parent=1 // pred_check
      _
    $region35: #{tpu_custom_call.1} parent=1 // pred_check_branch
      %215 = sbr.rel (0) target = $region37
    $region36: #{tpu_custom_call.1} parent=1 // pred_region
      %216 = dma.done [#allocation4], 16
    $region37: #{tpu_custom_call.1} parent=1 // pred_fallthru
      _
    // Predicated region
    $region38: #{tpu_custom_call.1} parent=1 // pred_check
      _
    $region39: #{tpu_custom_call.1} parent=1 // pred_check_branch
      %218 = sbr.rel (0) target = $region41
    $region40: #{tpu_custom_call.1} parent=1 // pred_region
      %219 = dma.done [#allocation9], 16
    $region41: #{tpu_custom_call.1} parent=1 // pred_fallthru
      _
    %220 = vsyncpa [#allocation3], 1
    %221 = vsyncpa [#allocation6], 1
    %222 = vsyncpa [#allocation4], 1
    %223 = vsyncpa [#allocation9], 1

</llo_original>
